<compile_context>
chip_gen: v6e
topology: v6e:2x2x1
jax: 0.10.0
libtpu: 0.0.40
codegen_flags: <defaults>
</compile_context>

<pallas_src>
import functools

import jax
import jax.numpy as jnp
from jax import lax
from jax.experimental import pallas as pl
from jax.experimental.pallas import tpu as pltpu


_VMEM_LIMIT = 32 * 1024 * 1024  # safe on v5e/v6e/v7x, leaves headroom


def _pick_batch_tile(batch, preferred=8):
    """Largest tile <= preferred that divides batch (avoids padded edge blocks)."""
    t = min(preferred, batch)
    while batch % t:
        t -= 1
    return t


# ---------------------------------------------------------------------------
# Kernel A: L2-normalize the prompt keys  [P, C] -> [P, C]
# ---------------------------------------------------------------------------
def _key_norm_kernel(key_ref, knorm_ref):
    eps = jnp.float32(1e-12)
    k = key_ref[...].astype(jnp.float32)
    k_sq = jnp.sum(k * k, axis=1, keepdims=True)
    knorm_ref[...] = k * lax.rsqrt(jnp.maximum(k_sq, eps))


def key_norm_pallas(prompt_key):
    P, C = prompt_key.shape
    return pl.pallas_call(
        _key_norm_kernel,
        out_shape=jax.ShapeDtypeStruct((P, C), jnp.float32),
        in_specs=[pl.BlockSpec(memory_space=pltpu.MemorySpace.VMEM)],
        out_specs=pl.BlockSpec(memory_space=pltpu.MemorySpace.VMEM),
        compiler_params=pltpu.CompilerParams(vmem_limit_bytes=_VMEM_LIMIT),
    )(prompt_key)


# ---------------------------------------------------------------------------
# Kernel B: query reduction + L2 norm + similarity matmul (tiled over batch)
# ---------------------------------------------------------------------------
def _sim_kernel(x_ref, knorm_ref, xnorm_ref, sim_ref):
    # x_ref: [TB, N, C]; knorm_ref: [P, C]
    eps = jnp.float32(1e-12)
    n_tok = x_ref.shape[1]

    # embedding_key == 'mean'
    # TODO(synk): 'max' / 'mean_max' / 'cls' embedding_key variants not wired up.
    x_vec = jnp.sum(x_ref[...].astype(jnp.float32), axis=1) * (1.0 / n_tok)
    x_sq = jnp.sum(x_vec * x_vec, axis=1, keepdims=True)
    x_norm = x_vec * lax.rsqrt(jnp.maximum(x_sq, eps))              # [TB, C]
    xnorm_ref[...] = x_norm

    # Contract dim 1 of both operands: avoids materializing knorm.T.
    sim_ref[...] = lax.dot_general(
        x_norm, knorm_ref[...],
        dimension_numbers=(((1,), (1,)), ((), ())),
        preferred_element_type=jnp.float32)                         # [TB, P]


def similarity_pallas(x_embed, prompt_norm, *, tb_pref=8):
    B, N, C = x_embed.shape
    P, _ = prompt_norm.shape
    tb = _pick_batch_tile(B, tb_pref)
    grid = (B // tb,)
    return pl.pallas_call(
        _sim_kernel,
        out_shape=(
            jax.ShapeDtypeStruct((B, C), jnp.float32),   # x_embed_norm
            jax.ShapeDtypeStruct((B, P), jnp.float32),   # similarity
        ),
        grid_spec=pltpu.PrefetchScalarGridSpec(
            num_scalar_prefetch=0,
            grid=grid,
            in_specs=[
                pl.BlockSpec((tb, N, C), lambda i: (i, 0, 0)),
                pl.BlockSpec((P, C), lambda i: (0, 0)),   # resident, constant
            ],
            out_specs=[
                pl.BlockSpec((tb, C), lambda i: (i, 0)),
                pl.BlockSpec((tb, P), lambda i: (i, 0)),
            ],
        ),
        compiler_params=pltpu.CompilerParams(
            dimension_semantics=("parallel",),            # megacore split
            vmem_limit_bytes=_VMEM_LIMIT),
    )(x_embed, prompt_norm)


# ---------------------------------------------------------------------------
# Kernel C: fused prompt gather + concat with x_embed
#   output[b] = concat(prompt[idx[b, 0]], ..., prompt[idx[b, K-1]], x_embed[b])
# ---------------------------------------------------------------------------
def _gather_concat_kernel(idx_ref, prompt_ref, x_ref, out_ref):
    # idx_ref:    [B, K] int32 in SMEM (scalar prefetch)
    # prompt_ref: [P, L, C] whole pool resident in VMEM
    # x_ref:      [TB, N, C] batch tile
    # out_ref:    [TB, K*L + N, C] output tile (lane-dense in C)
    i = pl.program_id(0)
    tb, n_tok, _ = x_ref.shape
    _, length, _ = prompt_ref.shape
    kl = out_ref.shape[1] - n_tok
    top_k = kl // length

    for r in range(tb):                    # tb small (<= 8), fully unrolled
        for j in range(top_k):             # K tiny (e.g. <= 5)
            row = idx_ref[i * tb + r, j]   # dynamic pool-row index (SMEM)
            out_ref[pl.ds(r, 1), pl.ds(j * length, length), :] = (
                prompt_ref[pl.ds(row, 1), :, :].astype(out_ref.dtype))
    # Append the original embeddings (static destination slice).
    out_ref[:, pl.ds(kl, n_tok), :] = x_ref[...].astype(out_ref.dtype)


def gather_concat_pallas(idx, prompt, x_embed, *, tb_pref=8):
    B, N, C = x_embed.shape
    P, L, _ = prompt.shape
    K = idx.shape[1]
    total = K * L + N
    tb = _pick_batch_tile(B, tb_pref)
    grid = (B // tb,)
    return pl.pallas_call(
        _gather_concat_kernel,
        out_shape=jax.ShapeDtypeStruct((B, total, C), x_embed.dtype),
        grid_spec=pltpu.PrefetchScalarGridSpec(
            num_scalar_prefetch=1,
            grid=grid,
            in_specs=[
                pl.BlockSpec((P, L, C), lambda i, idx_ref: (0, 0, 0)),  # pool stays put
                pl.BlockSpec((tb, N, C), lambda i, idx_ref: (i, 0, 0)),
            ],
            out_specs=pl.BlockSpec((tb, total, C), lambda i, idx_ref: (i, 0, 0)),
        ),
        compiler_params=pltpu.CompilerParams(
            dimension_semantics=("parallel",),    # disjoint output blocks per tile
            vmem_limit_bytes=_VMEM_LIMIT),
    )(idx.astype(jnp.int32), prompt, x_embed)


# ---------------------------------------------------------------------------
# Full forward (prompt_pool=True, prompt_key=True, embedding_key='mean')
# ---------------------------------------------------------------------------
def prompt_forward(params, x_embed, top_k, prompt_mask=None):
    # TODO(synk): prompt_pool=False path (plain broadcast of a single prompt)
    # not implemented; this covers the L2P prompt-pool configuration.
    prompt = params['prompt']            # [P, L, C]
    prompt_key = params['prompt_key']    # [P, C]
    B, _, C = x_embed.shape
    P, L, _ = prompt.shape

    prompt_norm = key_norm_pallas(prompt_key)
    x_embed_norm, similarity = similarity_pallas(x_embed, prompt_norm)

    if prompt_mask is None:
        _, idx = lax.top_k(similarity, top_k)            # [B, K]
        # TODO(synk): batchwise_prompt (torch.unique + counts majority vote)
        # path is not implemented; module default batchwise_prompt=False used.
    else:
        idx = prompt_mask
    idx = idx.astype(jnp.int32)

    prompted_embedding = gather_concat_pallas(idx, prompt, x_embed)  # [B, K*L+N, C]

    # selected_key is a tiny [B, K, C] gather; reduce_sim equals the sum of
    # the selected similarity entries (selected_key[b,j] . x_embed_norm[b]).
    selected_key = prompt_norm[idx]                              # [B, K, C]
    reduce_sim = jnp.sum(jnp.take_along_axis(similarity, idx, axis=1)) / B

    out = {
        'prompt_idx': idx,
        'prompt_norm': prompt_norm,
        'x_embed_norm': x_embed_norm,
        'similarity': similarity,
        'selected_key': selected_key,
        'reduce_sim': reduce_sim,
        'total_prompt_len': top_k * L,
        'prompted_embedding': prompted_embedding,
    }
    return out


if __name__ == "__main__":
    # Small shapes consistent with the module: B=2 batch, N=8 tokens, C=32 dim,
    # pool_size=8, prompt length=4, top_k=2.
    B, N, C = 2, 8, 32
    P, L, K = 8, 4, 2

    key = jax.random.PRNGKey(0)
    k1, k2, k3 = jax.random.split(key, 3)
    x_embed = jax.random.normal(k1, (B, N, C), dtype=jnp.float32)
    # prompt_init='uniform' / prompt_key_init='uniform' -> uniform [0, 1)
    params = {
        'prompt': jax.random.uniform(k2, (P, L, C), dtype=jnp.float32),
        'prompt_key': jax.random.uniform(k3, (P, C), dtype=jnp.float32),
    }

    out = prompt_forward(params, x_embed, top_k=K)
    out = jax.block_until_ready(out)

    # Plain-JAX reference for sanity checking the Pallas kernels.
    def _l2n(v, axis):
        sq = jnp.sum(v * v, axis=axis, keepdims=True)
        return v * lax.rsqrt(jnp.maximum(sq, 1e-12))

    x_mean = jnp.mean(x_embed, axis=1)
    pn_ref = _l2n(params['prompt_key'], 1)
    xn_ref = _l2n(x_mean, 1)
    sim_ref = xn_ref @ pn_ref.T
    _, idx_ref = lax.top_k(sim_ref, K)
    bp_ref = params['prompt'][idx_ref].reshape(B, K * L, C)
    selk_ref = pn_ref[idx_ref]
    rs_ref = jnp.sum(selk_ref * xn_ref[:, None, :]) / B
    pe_ref = jnp.concatenate([bp_ref, x_embed], axis=1)

    assert jnp.allclose(out['similarity'], sim_ref, atol=1e-5)
    assert jnp.allclose(out['x_embed_norm'], xn_ref, atol=1e-5)
    assert jnp.allclose(out['prompt_norm'], pn_ref, atol=1e-5)
    assert jnp.array_equal(out['prompt_idx'], idx_ref)
    assert jnp.allclose(out['prompted_embedding'], pe_ref, atol=1e-6)
    assert jnp.allclose(out['selected_key'], selk_ref, atol=1e-5)
    assert jnp.allclose(out['reduce_sim'], rs_ref, atol=1e-5)
    assert out['total_prompt_len'] == K * L

    print("KERNEL_OK")
</pallas_src>

<mosaic_0001>
module attributes {stable_mosaic.version = 11 : i64} {
  func.func @_key_norm_kernel(%arg0: memref<8x32xf32, #tpu.memory_space<vmem>>, %arg1: memref<8x32xf32, #tpu.memory_space<vmem>>) attributes {dimension_semantics = [], scalar_prefetch = 0 : i64, scratch_operands = 0 : i64, tpu.core_type = #tpu.core_type<tc>} {
    %c0 = arith.constant 0 : index
    %c0_0 = arith.constant 0 : index
    %0 = vector.load %arg0[%c0, %c0_0] : memref<8x32xf32, #tpu.memory_space<vmem>>, vector<8x32xf32>
    %1 = arith.mulf %0, %0 : vector<8x32xf32>
    %cst = arith.constant dense<0.000000e+00> : vector<8xf32>
    %2 = vector.multi_reduction <add>, %1, %cst [1] : vector<8x32xf32> to vector<8xf32>
    %3 = vector.shape_cast %2 : vector<8xf32> to vector<8x1xf32>
    %cst_1 = arith.constant 9.99999996E-13 : f32
    %4 = vector.broadcast %cst_1 : f32 to vector<8x1xf32>
    %5 = arith.maximumf %3, %4 : vector<8x1xf32>
    %6 = math.rsqrt %5 : vector<8x1xf32>
    %7 = vector.broadcast %6 : vector<8x1xf32> to vector<8x32xf32>
    %8 = arith.mulf %0, %7 : vector<8x32xf32>
    %c0_2 = arith.constant 0 : index
    %c0_3 = arith.constant 0 : index
    %9 = vector.load %arg1[%c0_2, %c0_3] : memref<8x32xf32, #tpu.memory_space<vmem>>, vector<8x32xf32>
    tpu.vector_store %arg1[%c0_2, %c0_3], %8 {strides = array<i32>} : memref<8x32xf32, #tpu.memory_space<vmem>>, vector<8x32xf32>,
    return
  }
}

</mosaic_0001>

<llo_original>
// kernel: tpu_custom_call.1
$region0: #{tpu_custom_call.1}
  #allocation0 [shape = 'u32[]', space=smem, size = 0x4, offset = 0x4, fixed_abs, tag = 'smem constant byte address 0x4 - core index']
  #allocation1 [shape = 'u32[144,128]{1,0:T(1,128)}', space=vmem, size = 0x12000, scoped, tag = 'internal scratch']
  %s0 = inlined_call_operand.hbm [shape: f32[8,32], index: 0, kind: input, shape index: {}]
  %s1 = inlined_call_operand.hbm [shape: f32[8,32], index: 1, kind: output, shape index: {}]
  %s2 = sld [smem:[#allocation0]]
  $region18: #{tpu_custom_call.1} parent=0
    _
  %s4 = ssub.s32 1, %s2
  %s5 = scalar_select 0, %s4, %s2
  $region1: #{tpu_custom_call.1} parent=0
    #allocation2 [shape = 'u8[4096]{0}', space=vmem, size = 0x1000, scoped, tag = 'input window, operand 0, single buffered']
    #allocation3 [shape = 's32[1]{0}', space=sflag, size = 0x4, scoped, tag = 'scoped memory for tpu_custom_call.1']
    #allocation4 [shape = 's32[1]{0}', space=sflag, size = 0x4, scoped, tag = 'scoped memory for tpu_custom_call.1']
    #allocation5 [shape = 'u8[4096]{0}', space=vmem, size = 0x1000, scoped, tag = 'output window, operand 0, single buffered']
    %6 = vsyncpa [#allocation3], 0
    %7 = vsyncpa [#allocation4], 0
    // Predicated region
    $region2: #{tpu_custom_call.1} parent=1 // pred_check
      _
    $region3: #{tpu_custom_call.1} parent=1 // pred_check_branch
      %9 = sbr.rel (0) target = $region5
    $region4: #{tpu_custom_call.1} parent=1 // pred_region
      %s11 = ssub.s32 128, 128
      %12 = vsyncadd [#allocation3], %s11
      %s14 = sshll.u32 [#allocation2], 4
      %s15 = int_to_ptr.vmem [resolvable:$true] %s14
      %17 = dma.hbm_to_vmem [thread:$0]  %s0, 128, %s15, [#allocation3]
    $region5: #{tpu_custom_call.1} parent=1 // pred_fallthru
      _
    // Predicated region
    $region6: #{tpu_custom_call.1} parent=1 // pred_check
      _
    $region7: #{tpu_custom_call.1} parent=1 // pred_check_branch
      %19 = sbr.rel (0) target = $region9
    $region8: #{tpu_custom_call.1} parent=1 // pred_region
      %20 = dma.done [#allocation3], 128
    $region9: #{tpu_custom_call.1} parent=1 // pred_fallthru
      _
    %v21 = vld [vmem:[#allocation2] sm:$0xff]
    %v22 = vmul.f32 %v21, %v21
    %vm23 = vcmask 261120
    %v24 = vsel %vm23, %v22, 0.0
    %25 = vadd.xlane.f32.xlu0 %v24
    %v26 = vpop.xlane.xlu0 %25
    %v27 = vmax.f32 %v26, 1e-12
    %v28 = vrsqrt.pop %v27
    %v29 = vmul.f32 %v21, %v28
    %30 = vst.msk [vmem:[#allocation5] sm:$0xff] %vm23, %v29
    // Predicated region
    $region10: #{tpu_custom_call.1} parent=1 // pred_check
      _
    $region11: #{tpu_custom_call.1} parent=1 // pred_check_branch
      %32 = sbr.rel (0) target = $region13
    $region12: #{tpu_custom_call.1} parent=1 // pred_region
      %s34 = ssub.s32 128, 128
      %35 = vsyncadd [#allocation4], %s34
      %s37 = sshll.u32 [#allocation5], 4
      %s38 = int_to_ptr.vmem [resolvable:$true] %s37
      %40 = dma.vmem_to_hbm [thread:$0]  %s38, 128, %s1, [#allocation4]
    $region13: #{tpu_custom_call.1} parent=1 // pred_fallthru
      _
    // Predicated region
    $region14: #{tpu_custom_call.1} parent=1 // pred_check
      _
    $region15: #{tpu_custom_call.1} parent=1 // pred_check_branch
      %42 = sbr.rel (0) target = $region17
    $region16: #{tpu_custom_call.1} parent=1 // pred_region
      %43 = dma.done [#allocation4], 128
    $region17: #{tpu_custom_call.1} parent=1 // pred_fallthru
      _
    %44 = vsyncpa [#allocation3], 1
    %45 = vsyncpa [#allocation4], 1

</llo_original>
